<compile_context>
chip_gen: v7x
topology: tpu7x:2x2x1
jax: 0.10.0
libtpu: 0.0.40
codegen_flags: <defaults>
</compile_context>

<pallas_src>
import jax
import jax.numpy as jnp
from jax.experimental import pallas as pl
from jax.experimental.pallas import tpu as pltpu


def _round_up(n, m):
    return ((n + m - 1) // m) * m


def fm_kernel(x_ref, v_ref, w_ref, s_ref, b_ref, o_ref):
    """One batch tile of the FM forward pass.

    x_ref: [TB, D]  VMEM, streamed per grid step (native f32/bf16)
    v_ref: [D, K]   VMEM, resident across the grid
    w_ref: [1, D]   VMEM, resident (linear weight)
    s_ref: [1, D]   VMEM, resident (s[d] = 0.5 * sum_k v[d, k]^2)
    b_ref: [1, 1]   SMEM  (linear bias)
    o_ref: [1, TB]  lane-dense output tile
    """
    x = x_ref[...].astype(jnp.float32)      # [TB, D]
    w = w_ref[...]                          # [1, D]
    s = s_ref[...]                          # [1, D]  (0.5 already folded in)
    bias = b_ref[0, 0]                      # scalar from SMEM

    # Single MXU matmul: x @ v  -> [TB, K]
    ip = jnp.dot(x, v_ref[...], preferred_element_type=jnp.float32)

    # VPU mul + XLU reduce: linear term and the (x^2 @ v^2) term folded into
    # one weighted per-row reduce (0.5 is pre-folded into s on the host).
    row = jnp.sum(x * w - (x * x) * s, axis=1)       # [TB]
    pair = 0.5 * jnp.sum(ip * ip, axis=1)            # [TB]

    out = row + pair + bias                          # [TB]
    o_ref[...] = out.reshape(1, -1).astype(o_ref.dtype)   # lane-dense store


def _vmem_budget_bytes():
    """~75% of physical VMEM per TensorCore (v5e/v6e: 128 MiB, v7x: 64 MiB)."""
    try:
        cap = int(pltpu.get_tpu_info().vmem_capacity_bytes)
    except Exception:
        cap = 64 * 1024 * 1024  # conservative fallback (v7x-sized)
    return (cap * 3) // 4


def factorization_machine(x, v, w, b, *, target_tile_bytes=2 << 20):
    """x: [B, D], v: [D, K], w: [1, D] (nn.Linear weight), b: [1, 1] bias."""
    B, D = x.shape
    K = v.shape[1]

    # Stream x in its native dtype (f32 / bf16) and upcast inside the kernel;
    # adding a host-side cast would be an extra full HBM pass over x.
    if x.dtype not in (jnp.float32, jnp.bfloat16):
        x = x.astype(jnp.float32)
    v = jnp.asarray(v).astype(jnp.float32)
    w = jnp.asarray(w).reshape(1, D).astype(jnp.float32)
    b = jnp.asarray(b).reshape(1, 1).astype(jnp.float32)

    # Grid-invariant precompute (tiny [1, D]), 0.5 folded in:
    #   s[d] = 0.5 * sum_k v[d, k]^2
    s = 0.5 * jnp.sum(v * v, axis=1).reshape(1, D)

    itemsize = jnp.dtype(x.dtype).itemsize
    vmem_budget = _vmem_budget_bytes()
    resident_bytes = D * K * 4 + 2 * D * 4            # v, w, s (f32, resident)

    if B <= 128:
        # Single tile: blocks equal the full arrays (legal for any B, no pad);
        # output block's last dim equals the full dim so no 128-alignment
        # requirement applies.
        tb = B
    else:
        # Byte-sized batch tile: ~target_tile_bytes of streamed x per grid
        # step, multiple of 128 (MXU M-dim + lane-dense out block alignment).
        tb = _round_up(max(128, target_tile_bytes // (D * itemsize)), 128)
        # Cap so double-buffered x (+ double-buffered out) and the resident
        # operands fit the per-generation VMEM budget.
        per_row = 2 * D * itemsize + 2 * 4
        tb_cap = max(128, ((vmem_budget - resident_bytes) // per_row) // 128 * 128)
        tb = min(tb, tb_cap)
        # Guarantee >= 2 tiles so both v7x TensorCores get work.
        tb = min(tb, _round_up(pl.cdiv(B, 2), 128))

    num_tiles = pl.cdiv(B, tb)   # boundary block handles a ragged last tile

    # VMEM limit derived from the actual footprint, with headroom, clamped to
    # the per-generation budget (never the hardcoded scoped default).
    footprint = resident_bytes + 2 * tb * D * itemsize + 2 * _round_up(tb, 128) * 4
    vmem_limit = int(min(vmem_budget, max(32 * 1024 * 1024, 2 * footprint)))

    out = pl.pallas_call(
        fm_kernel,
        out_shape=jax.ShapeDtypeStruct((1, B), jnp.float32),
        grid_spec=pltpu.PrefetchScalarGridSpec(
            num_scalar_prefetch=0,
            grid=(num_tiles,),
            in_specs=[
                pl.BlockSpec((tb, D), lambda i: (i, 0)),            # x (streamed)
                pl.BlockSpec((D, K), lambda i: (0, 0)),             # v (resident)
                pl.BlockSpec((1, D), lambda i: (0, 0)),             # w (resident)
                pl.BlockSpec((1, D), lambda i: (0, 0)),             # s (resident)
                pl.BlockSpec(memory_space=pltpu.MemorySpace.SMEM),  # bias scalar
            ],
            out_specs=pl.BlockSpec((1, tb), lambda i: (0, i)),      # lane-dense
        ),
        compiler_params=pltpu.CompilerParams(
            dimension_semantics=("parallel",),
            vmem_limit_bytes=vmem_limit,
        ),
    )(x, v, w, s, b)

    return out.reshape(B, 1)


def reference(x, v, w, b):
    linear_part = x @ w.T + b                       # [B, 1]
    ip1 = x @ v
    ip2 = (x ** 2) @ (v ** 2)
    pair = jnp.sum(ip1 ** 2 - ip2, axis=1)          # [B]
    out = linear_part.T + 0.5 * pair                # [1, B]
    return out.reshape(-1, 1)                       # [B, 1]


if __name__ == "__main__":
    in_dim, k = 32, 16
    key = jax.random.PRNGKey(0)
    kx, kw, kb, kx2 = jax.random.split(key, 4)

    # Parameters (matching the PyTorch __init__):
    v = jnp.full((in_dim, k), 0.001, dtype=jnp.float32)                # nn.Parameter
    w = 0.001 * jax.random.normal(kw, (1, in_dim), dtype=jnp.float32)  # Linear weight
    bound = 1.0 / (in_dim ** 0.5)
    b = jax.random.uniform(kb, (1, 1), minval=-bound, maxval=bound,
                           dtype=jnp.float32)                          # Linear bias

    # Test 1: small batch -> single full-array tile (no padding anywhere).
    B = 8
    x = jax.random.normal(kx, (B, in_dim), dtype=jnp.float32)
    out = factorization_machine(x, v, w, b)
    jax.block_until_ready(out)
    ref = reference(x, v, w, b)
    assert out.shape == (B, 1)
    assert jnp.allclose(out, ref, atol=1e-5, rtol=1e-5), (out, ref)

    # Test 2: ragged batch -> >=2 tiles (v7x megacore path) with a partial
    # boundary tile handled by Pallas (no host-side jnp.pad of x).
    B2 = 300
    x2 = jax.random.normal(kx2, (B2, in_dim), dtype=jnp.float32)
    out2 = factorization_machine(x2, v, w, b)
    jax.block_until_ready(out2)
    ref2 = reference(x2, v, w, b)
    assert out2.shape == (B2, 1)
    assert jnp.allclose(out2, ref2, atol=1e-5, rtol=1e-5)

    print("KERNEL_OK")
</pallas_src>

<mosaic_0001>
module attributes {stable_mosaic.version = 11 : i64} {
  func.func @fm_kernel(%arg0: i32, %arg1: memref<8x32xf32, #tpu.memory_space<vmem>>, %arg2: memref<32x16xf32, #tpu.memory_space<vmem>>, %arg3: memref<1x32xf32, #tpu.memory_space<vmem>>, %arg4: memref<1x32xf32, #tpu.memory_space<vmem>>, %arg5: memref<1x1xf32, #tpu.memory_space<smem>>, %arg6: memref<1x8xf32, #tpu.memory_space<vmem>>) attributes {dimension_semantics = [#tpu.dimension_semantics<parallel>], iteration_bounds = array<i64: 1>, scalar_prefetch = 0 : i64, scratch_operands = 0 : i64, tpu.core_type = #tpu.core_type<tc>, window_params = [{transform_indices = @transform_0, window_bounds = array<i64: 8, 32>}, {pipeline_mode = #tpu.pipeline_mode<synchronous>, transform_indices = @transform_1, window_bounds = array<i64: 32, 16>}, {pipeline_mode = #tpu.pipeline_mode<synchronous>, transform_indices = @transform_2, window_bounds = array<i64: 1, 32>}, {pipeline_mode = #tpu.pipeline_mode<synchronous>, transform_indices = @transform_3, window_bounds = array<i64: 1, 32>}, {transform_indices = @transform_4, window_bounds = array<i64: 1, 1>}, {transform_indices = @transform_5, window_bounds = array<i64: 1, 8>}]} {
    %c0 = arith.constant 0 : index
    %c0_0 = arith.constant 0 : index
    %0 = vector.load %arg1[%c0, %c0_0] : memref<8x32xf32, #tpu.memory_space<vmem>>, vector<8x32xf32>
    %c0_1 = arith.constant 0 : index
    %c0_2 = arith.constant 0 : index
    %1 = vector.load %arg3[%c0_1, %c0_2] : memref<1x32xf32, #tpu.memory_space<vmem>>, vector<1x32xf32>
    %c0_3 = arith.constant 0 : index
    %c0_4 = arith.constant 0 : index
    %2 = vector.load %arg4[%c0_3, %c0_4] : memref<1x32xf32, #tpu.memory_space<vmem>>, vector<1x32xf32>
    %c0_5 = arith.constant 0 : index
    %c0_6 = arith.constant 0 : index
    %3 = memref.load %arg5[%c0_5, %c0_6] : memref<1x1xf32, #tpu.memory_space<smem>>
    %c0_7 = arith.constant 0 : index
    %c0_8 = arith.constant 0 : index
    %4 = vector.load %arg2[%c0_7, %c0_8] : memref<32x16xf32, #tpu.memory_space<vmem>>, vector<32x16xf32>
    %cst = arith.constant dense<0.000000e+00> : vector<8x16xf32>
    %5 = tpu.matmul %0, %4, %cst {dimension_numbers = #tpu.dot_dimension_numbers<[1], [0], [0], [1], [0, 0, 1, 1], [], []>} : vector<8x32xf32>, vector<32x16xf32>, vector<8x16xf32> -> vector<8x16xf32>
    %6 = vector.broadcast %1 : vector<1x32xf32> to vector<8x32xf32>
    %7 = arith.mulf %0, %6 : vector<8x32xf32>
    %8 = arith.mulf %0, %0 : vector<8x32xf32>
    %9 = vector.broadcast %2 : vector<1x32xf32> to vector<8x32xf32>
    %10 = arith.mulf %8, %9 : vector<8x32xf32>
    %11 = arith.subf %7, %10 : vector<8x32xf32>
    %cst_9 = arith.constant dense<0.000000e+00> : vector<8xf32>
    %12 = vector.multi_reduction <add>, %11, %cst_9 [1] : vector<8x32xf32> to vector<8xf32>
    %13 = arith.mulf %5, %5 : vector<8x16xf32>
    %cst_10 = arith.constant dense<0.000000e+00> : vector<8xf32>
    %14 = vector.multi_reduction <add>, %13, %cst_10 [1] : vector<8x16xf32> to vector<8xf32>
    %cst_11 = arith.constant 5.000000e-01 : f32
    %15 = vector.broadcast %cst_11 : f32 to vector<8xf32>
    %16 = arith.mulf %15, %14 : vector<8xf32>
    %17 = arith.addf %12, %16 : vector<8xf32>
    %18 = vector.broadcast %3 : f32 to vector<8xf32>
    %19 = arith.addf %17, %18 : vector<8xf32>
    %20 = vector.shape_cast %19 : vector<8xf32> to vector<1x8xf32>
    %c0_12 = arith.constant 0 : index
    %c0_13 = arith.constant 0 : index
    %21 = vector.load %arg6[%c0_12, %c0_13] : memref<1x8xf32, #tpu.memory_space<vmem>>, vector<1x8xf32>
    tpu.vector_store %arg6[%c0_12, %c0_13], %20 {strides = array<i32>} : memref<1x8xf32, #tpu.memory_space<vmem>>, vector<1x8xf32>,
    return
  }
  func.func @transform_0(%arg0: i32) -> (i32, i32) {
    %c0_i32 = arith.constant 0 : i32
    %c0_i32_0 = arith.constant 0 : i32
    return %arg0, %c0_i32 : i32, i32
  }
  func.func @transform_1(%arg0: i32) -> (i32, i32) {
    %c0_i32 = arith.constant 0 : i32
    %c0_i32_0 = arith.constant 0 : i32
    %c0_i32_1 = arith.constant 0 : i32
    return %c0_i32, %c0_i32_0 : i32, i32
  }
  func.func @transform_2(%arg0: i32) -> (i32, i32) {
    %c0_i32 = arith.constant 0 : i32
    %c0_i32_0 = arith.constant 0 : i32
    %c0_i32_1 = arith.constant 0 : i32
    return %c0_i32, %c0_i32_0 : i32, i32
  }
  func.func @transform_3(%arg0: i32) -> (i32, i32) {
    %c0_i32 = arith.constant 0 : i32
    %c0_i32_0 = arith.constant 0 : i32
    %c0_i32_1 = arith.constant 0 : i32
    return %c0_i32, %c0_i32_0 : i32, i32
  }
  func.func @transform_4(%arg0: i32) -> (i32, i32) {
    %c0_i32 = arith.constant 0 : i32
    %c0_i32_0 = arith.constant 0 : i32
    %c0_i32_1 = arith.constant 0 : i32
    return %c0_i32, %c0_i32_0 : i32, i32
  }
  func.func @transform_5(%arg0: i32) -> (i32, i32) {
    %c0_i32 = arith.constant 0 : i32
    %c0_i32_0 = arith.constant 0 : i32
    return %c0_i32, %arg0 : i32, i32
  }
}

</mosaic_0001>

<llo_original>
// kernel: tpu_custom_call.1
$region0: #{tpu_custom_call.1}
  #allocation0 [shape = 'u32[]', space=smem, size = 0x4, offset = 0x4, fixed_abs, tag = 'smem constant byte address 0x4 - core index']
  #allocation1 [shape = 'u32[144,128]{1,0:T(1,128)}', space=vmem, size = 0x12000, scoped, tag = 'internal scratch']
  #allocation2 [shape = 'f32[1,1]{1,0:T(1,128)S(6)}', space=smem, size = 0x200, scoped, tag = 'scoped memory for tpu_custom_call.1']
  %s0 = inlined_call_operand.vmem [shape: f32[8,32], index: 0, kind: input, shape index: {}]
  %s1 = inlined_call_operand.vmem [shape: f32[32,16], index: 1, kind: input, shape index: {}]
  %s2 = inlined_call_operand.vmem [shape: f32[1,32], index: 2, kind: input, shape index: {}]
  %s3 = inlined_call_operand.vmem [shape: f32[1,32], index: 3, kind: input, shape index: {}]
  %s4 = inlined_call_operand.<no memory space> [shape: f32[1,1], index: 4, kind: input, shape index: {}]
  %s5 = inlined_call_operand.hbm [shape: f32[1,8], index: 5, kind: output, shape index: {}]
  %s6 = sld [smem:[#allocation0]]
  $region30: #{tpu_custom_call.1} parent=0
    _
  %s8 = ssub.s32 1, %s6
  %s9 = scalar_select 0, %s8, %s6
  %10 = sst [smem:[#allocation2]] %s4
  $region1: #{tpu_custom_call.1} parent=0
    #allocation3 [shape = 'u8[512]{0}', space=vmem, size = 0x400, scoped, tag = 'output window, operand 0, single buffered']
    #allocation4 [shape = 's32[1]{0}', space=sflag, size = 0x4, scoped, tag = 'scoped memory for tpu_custom_call.1']
    %11 = vsyncpa [#allocation4], 0
    // Predicated region
    $region2: #{tpu_custom_call.1} parent=1 // pred_check
      _
    $region3: #{tpu_custom_call.1} parent=1 // pred_check_branch
      %13 = sbr.rel (0) target = $region5
    $region4: #{tpu_custom_call.1} parent=1 // pred_region
      _
    $region5: #{tpu_custom_call.1} parent=1 // pred_fallthru
      _
    // Predicated region
    $region6: #{tpu_custom_call.1} parent=1 // pred_check
      _
    $region7: #{tpu_custom_call.1} parent=1 // pred_check_branch
      %15 = sbr.rel (0) target = $region9
    $region8: #{tpu_custom_call.1} parent=1 // pred_region
      _
    $region9: #{tpu_custom_call.1} parent=1 // pred_fallthru
      _
    // Predicated region
    $region10: #{tpu_custom_call.1} parent=1 // pred_check
      _
    $region11: #{tpu_custom_call.1} parent=1 // pred_check_branch
      %17 = sbr.rel (0) target = $region13
    $region12: #{tpu_custom_call.1} parent=1 // pred_region
      _
    $region13: #{tpu_custom_call.1} parent=1 // pred_fallthru
      _
    // Predicated region
    $region14: #{tpu_custom_call.1} parent=1 // pred_check
      _
    $region15: #{tpu_custom_call.1} parent=1 // pred_check_branch
      %19 = sbr.rel (0) target = $region17
    $region16: #{tpu_custom_call.1} parent=1 // pred_region
      _
    $region17: #{tpu_custom_call.1} parent=1 // pred_fallthru
      _
    // Predicated region
    $region18: #{tpu_custom_call.1} parent=1 // pred_check
      _
    $region19: #{tpu_custom_call.1} parent=1 // pred_check_branch
      %21 = sbr.rel (0) target = $region21
    $region20: #{tpu_custom_call.1} parent=1 // pred_region
      _
    $region21: #{tpu_custom_call.1} parent=1 // pred_fallthru
      _
    %v22 = vld [vmem:[%s0] sm:$0xff]
    %v23 = vld [vmem:[%s2] sm:$0x1]
    %v24 = vld [vmem:[%s3] sm:$0x1]
    %s25 = sld [smem:[#allocation2]]
    %v26 = vld [vmem:[%s1] sm:$0xff]
    %v27 = vld [vmem:[%s1 + $0x8] sm:$0xff]
    %v28 = vld [vmem:[%s1 + $0x10] sm:$0xff]
    %v29 = vld [vmem:[%s1 + $0x18] sm:$0xff]
    %vm30 = vcmask 261120
    %v32 = vsel %vm30, %v22, 0
    %34 = vmatprep.subr.mxu0 0.0
    %35 = vmatpush1.msra.mxu0 %v26
    %36 = vmatprep.subr.mxu0 0.0
    %37 = vmatpush1.msra.mxu0 %v27
    %38 = vmatprep.subr.mxu0 0.0
    %39 = vmatpush1.msra.mxu0 %v28
    %40 = vmatprep.subr.mxu0 0.0
    %41 = vmatpush1.msra.mxu0 %v29
    %42 = vmatprep.subr.mxu0 0.0
    %43 = vmatpush1.msra.mxu0 0.0
    %44 = vmatprep.subr.mxu0 0.0
    %45 = vmatpush1.msra.mxu0 0.0
    %46 = vmatprep.subr.mxu0 0.0
    %47 = vmatpush1.msra.mxu0 0.0
    %48 = vmatprep.subr.mxu0 0.0
    %49 = vmatpush1.msra.mxu0 0.0
    %50 = vmatprep.subr.mxu0 0.0
    %51 = vmatpush1.msra.mxu0 0.0
    %52 = vmatprep.subr.mxu0 0.0
    %53 = vmatpush1.msra.mxu0 0.0
    %54 = vmatprep.subr.mxu0 0.0
    %55 = vmatpush1.msra.mxu0 0.0
    %56 = vmatprep.subr.mxu0 0.0
    %57 = vmatpush1.msra.mxu0 0.0
    %58 = vmatprep.subr.mxu0 0.0
    %59 = vmatpush1.msra.mxu0 0.0
    %60 = vmatprep.subr.mxu0 0.0
    %61 = vmatpush1.msra.mxu0 0.0
    %62 = vmatprep.subr.mxu0 0.0
    %63 = vmatpush1.msra.mxu0 0.0
    %64 = vmatprep.subr.mxu0 0.0
    %65 = vmatpush1.msra.mxu0 0.0
    %66 = vmatprep.subr.mxu0 0.0
    %67 = vmatpush1.msra.mxu0 0.0
    %68 = vmatprep.subr.mxu0 0.0
    %69 = vmatpush1.msra.mxu0 0.0
    %70 = vmatprep.subr.mxu0 0.0
    %71 = vmatpush1.msra.mxu0 0.0
    %72 = vmatprep.subr.mxu0 0.0
    %73 = vmatpush1.msra.mxu0 0.0
    %74 = vmatprep.subr.mxu0 0.0
    %75 = vmatpush1.msra.mxu0 0.0
    %76 = vmatprep.subr.mxu0 0.0
    %77 = vmatpush1.msra.mxu0 0.0
    %78 = vmatprep.subr.mxu0 0.0
    %79 = vmatpush1.msra.mxu0 0.0
    %80 = vmatprep.subr.mxu0 0.0
    %81 = vmatpush1.msra.mxu0 0.0
    %82 = vmatprep.subr.mxu0 0.0
    %83 = vmatpush1.msra.mxu0 0.0
    %84 = vmatprep.subr.mxu0 0.0
    %85 = vmatpush1.msra.mxu0 0.0
    %86 = vmatprep.subr.mxu0 0.0
    %87 = vmatpush1.msra.mxu0 0.0
    %88 = vmatprep.subr.mxu0 0.0
    %89 = vmatpush1.msra.mxu0 0.0
    %90 = vmatprep.subr.mxu0 0.0
    %91 = vmatpush1.msra.mxu0 0.0
    %92 = vmatprep.subr.mxu0 0.0
    %93 = vmatpush1.msra.mxu0 0.0
    %94 = vmatprep.subr.mxu0 0.0
    %95 = vmatpush1.msra.mxu0 0.0
    %96 = vmatprep.subr.mxu0 0.0
    %97 = vmatpush1.msra.mxu0 0.0
    %98 = vmatprep.mubr.f32.mxu0 0.0
    %99 = vmatmul.mubr.f32.gmra.mrb[0].mxu0 %v32
    %v100 = vpop.f32.mrb[0].mxu0
    %v101 = vadd.f32 0.0, %v100
    %v102 = vpop.f32.mrb[0].mxu0
    %103 = vdwg.mxu0
    %v105 = vlaneseq
    %v106 = vshrl.u32 %v105, 7
    %v107 = vsub.s32 0, %v106
    %v108 = vrot.slane %v23, %v107
    %v110 = vmul.f32 %v22, %v108
    %v111 = vmul.f32 %v22, %v22
    %v113 = vlaneseq
    %v114 = vshrl.u32 %v113, 7
    %v115 = vsub.s32 0, %v114
    %v116 = vrot.slane %v24, %v115
    %v118 = vmul.f32 %v111, %v116
    %v119 = vsub.f32 %v110, %v118
    %v120 = vsel %vm30, %v119, 0.0
    %121 = vadd.xlane.f32.xlu0 %v120
    %v122 = vpop.xlane.xlu0 %121
    %v123 = vmul.f32 %v101, %v101
    %vm124 = vcmask 130048
    %v125 = vsel %vm124, %v123, 0.0
    %126 = vadd.xlane.f32.xlu0 %v125
    %v127 = vpop.xlane.xlu0 %126
    %v128 = vmul.f32 %v127, 0.5
    %v129 = vadd.f32 %v122, %v128
    %v130 = vstv %s25
    %v131 = vadd.f32 %v129, %v130
    %v133 = vlaneseq
    %v134 = vand.u32 %v133, 127
    %v135 = vlaneseq
    %v136 = vshrl.u32 %v135, 7
    %v137 = vsub.s32 %v134, %v136
    %v138 = vrot.slane %v131, %v137
    %vm140 = vcmask 57344
    %141 = vst.msk [vmem:[#allocation3] sm:$0x1] %vm140, %v138
    // Predicated region
    $region22: #{tpu_custom_call.1} parent=1 // pred_check
      _
    $region23: #{tpu_custom_call.1} parent=1 // pred_check_branch
      %143 = sbr.rel (0) target = $region25
    $region24: #{tpu_custom_call.1} parent=1 // pred_region
      %s145 = ssub.s32 16, 16
      %146 = vsyncadd [#allocation4], %s145
      %s148 = sshll.u32 [#allocation3], 4
      %s149 = int_to_ptr.vmem [resolvable:$true] %s148
      %151 = dma.vmem_to_hbm [thread:$0]  %s149, 16, %s5, [#allocation4]
    $region25: #{tpu_custom_call.1} parent=1 // pred_fallthru
      _
    // Predicated region
    $region26: #{tpu_custom_call.1} parent=1 // pred_check
      _
    $region27: #{tpu_custom_call.1} parent=1 // pred_check_branch
      %153 = sbr.rel (0) target = $region29
    $region28: #{tpu_custom_call.1} parent=1 // pred_region
      %154 = dma.done [#allocation4], 16
    $region29: #{tpu_custom_call.1} parent=1 // pred_fallthru
      _
    %155 = vsyncpa [#allocation4], 1

</llo_original>
